<compile_context>
chip_gen: v7x
topology: tpu7x:2x2x1
jax: 0.10.0
libtpu: 0.0.40
codegen_flags: <defaults>
</compile_context>

<pallas_src>
import functools
import math

import jax
import jax.numpy as jnp
from jax import lax
from jax.experimental import pallas as pl
from jax.experimental.pallas import tpu as pltpu


# --------------------------------------------------------------------------------------
# encoder_embed kernels (tiny FLOPs; whole flattened batch per invocation, no grid)
# --------------------------------------------------------------------------------------
def _silu_linear_kernel(x_ref, w_ref, b_ref, o_ref):
    y = jnp.dot(x_ref[...].astype(jnp.bfloat16), w_ref[...],
                preferred_element_type=jnp.float32) + b_ref[...]
    o_ref[...] = y / (1.0 + jnp.exp(-y))          # SiLU (exact sigmoid)


def pallas_silu_linear(x2d, w, b):
    M, _ = x2d.shape
    C = w.shape[1]
    return pl.pallas_call(
        _silu_linear_kernel,
        out_shape=jax.ShapeDtypeStruct((M, C), jnp.float32),
    )(x2d, w, b.reshape(1, C))


def _conv2_embed_kernel(cols_ref, w2_ref, b2_ref, we_ref, be_ref, o_ref, *, f2):
    # conv2 (as per-frequency-position matmuls) + SiLU + embed projection, fused.
    pieces = []
    for f in range(f2):
        h = jnp.dot(cols_ref[f].astype(jnp.bfloat16), w2_ref[...],
                    preferred_element_type=jnp.float32) + b2_ref[...]
        pieces.append(h / (1.0 + jnp.exp(-h)))
    h = jnp.concatenate(pieces, axis=-1)          # (N*T2, F2*C2) f32
    o_ref[...] = jnp.dot(h.astype(jnp.bfloat16), we_ref[...],
                         preferred_element_type=jnp.float32) + be_ref[...]


def pallas_conv2_embed(cols, w2, b2, we, be):
    F2, M2, _ = cols.shape
    C2 = w2.shape[1]
    D = we.shape[1]
    return pl.pallas_call(
        functools.partial(_conv2_embed_kernel, f2=F2),
        out_shape=jax.ShapeDtypeStruct((M2, D), jnp.float32),
    )(cols, w2, b2.reshape(1, C2), we, be.reshape(1, D))


def _im2col(x, kh, kw, sh, sw):
    # x: (N, H, W, C) -> patches (N, Ho, Wo, kh*kw*C)  (host-side glue)
    N, H, W, C = x.shape
    Ho = (H - kh) // sh + 1
    Wo = (W - kw) // sw + 1
    cols = []
    for i in range(kh):
        for j in range(kw):
            cols.append(x[:, i:i + sh * Ho:sh, j:j + sw * Wo:sw, :])
    return jnp.concatenate(cols, axis=-1), Ho, Wo


def encoder_embed(x, x_lens, p):
    # TODO(synk): exact icefall Conv2dSubsampling uses 3 convs + a ConvNeXt block and
    # T' = (T-7)//2; here: two 3x3 stride-2 convs + projection (acknowledged stand-in).
    N, T, F = x.shape
    img = x[..., None]                                             # (N, T, F, 1)
    cols1, T1, F1 = _im2col(img, 3, 3, 2, 2)                       # (N, T1, F1, 9)
    h1 = pallas_silu_linear(cols1.reshape(N * T1 * F1, cols1.shape[-1]),
                            p["conv1_w"], p["conv1_b"])
    C1 = h1.shape[-1]
    h1 = h1.reshape(N, T1, F1, C1)
    cols2, T2, F2 = _im2col(h1, 3, 3, 2, 2)                        # (N, T2, F2, 9*C1)
    cols2 = jnp.transpose(cols2, (2, 0, 1, 3)).reshape(F2, N * T2, cols2.shape[-1])
    out = pallas_conv2_embed(cols2, p["conv2_w"], p["conv2_b"],
                             p["embed_w"], p["embed_b"])           # (N*T2, D)
    out = out.reshape(N, T2, out.shape[-1])
    l1 = (x_lens - 3) // 2 + 1
    l2 = (l1 - 3) // 2 + 1
    return out, jnp.maximum(l2, 0).astype(jnp.int32)


# --------------------------------------------------------------------------------------
# Fused encoder (all layers) + CTC head: single pallas_call, grid = (batch_chunks, layers)
# --------------------------------------------------------------------------------------
def _encoder_ctc_kernel(lens_ref, x_ref,
                        ln1g_ref, ln1b_ref, wqkv_ref, bqkv_ref, wo_ref, bo_ref,
                        ln2g_ref, ln2b_ref, w1_ref, b1_ref, w2_ref, b2_ref,
                        wctc_ref, bctc_ref,
                        o_ref, act_ref,
                        *, num_heads, batch_block, seq_len):
    bc = pl.program_id(0)
    layer = pl.program_id(1)
    num_layers = pl.num_programs(1)

    M, D = act_ref.shape                       # M = batch_block * T
    T = seq_len
    H = num_heads
    Dh = D // H
    scale = 1.0 / math.sqrt(Dh)

    @pl.when(layer == 0)
    def _():
        act_ref[...] = x_ref[...].reshape(M, D)

    x = act_ref[...]                           # (M, D) f32

    def layer_norm(z, g_ref, b_ref):
        # TODO(synk): Zipformer2 uses BiasNorm; LayerNorm used as stand-in.
        mu = jnp.mean(z, axis=-1, keepdims=True)
        var = jnp.mean((z - mu) ** 2, axis=-1, keepdims=True)
        return (z - mu) * lax.rsqrt(var + 1e-5) * g_ref[0] + b_ref[0]

    # ---------------- self-attention sub-block (pre-norm) ----------------
    h = layer_norm(x, ln1g_ref, ln1b_ref)
    # fused QKV matmul over the whole batch chunk (bf16 MXU operands, f32 accumulate);
    # cast to bf16 with the bias add so only one copy of qkv stays live.
    qkv = (jnp.dot(h.astype(jnp.bfloat16), wqkv_ref[0],
                   preferred_element_type=jnp.float32) + bqkv_ref[0]
           ).astype(jnp.bfloat16)              # (M, 3D)
    q = qkv[:, :D]                             # 128-lane-aligned column slices
    k = qkv[:, D:2 * D]
    v = qkv[:, 2 * D:]

    ctx_rows = []
    for b in range(batch_block):               # static, small
        rows = slice(b * T, (b + 1) * T)        # T is a multiple of 16 -> aligned rows
        # head-major, transposed layouts via 2D transposes + leading-dim reshapes only
        qT = q[rows].T.reshape(H, Dh, T)        # (H, Dh, T)
        kT = k[rows].T.reshape(H, Dh, T)
        vT = v[rows].T.reshape(H, Dh, T)
        # additive key-padding mask from the SMEM lengths (keys live on sublanes here)
        length = lens_ref[bc * batch_block + b]
        key_ids = lax.broadcasted_iota(jnp.int32, (T, 1), 0)
        msk = jnp.where(key_ids >= length, -1e30, 0.0)             # (S, 1) f32
        heads = []
        for hh in range(H):
            # scores stored key-major (S, T); softmax over keys = sublane reduction.
            # TODO(synk): for production T, pad T to a multiple of 128 and use a
            # flash-style KV-tiled online softmax (VMEM O(T*Dh)).
            sT = jnp.dot(kT[hh].T, qT[hh],
                         preferred_element_type=jnp.float32) * scale + msk   # (S, T)
            mx = jnp.max(sT, axis=0, keepdims=True)
            p = jnp.exp(sT - mx)
            p = p / jnp.sum(p, axis=0, keepdims=True)              # exact reciprocal
            heads.append(jnp.dot(vT[hh], p.astype(jnp.bfloat16),
                                 preferred_element_type=jnp.float32))        # (Dh, T)
        ctxT = jnp.concatenate(heads, axis=0)   # (D, T) sublane concat (no lane shuffle)
        ctx_rows.append(ctxT.T)                 # (T, D) lane-dense
    ctx = ctx_rows[0] if batch_block == 1 else jnp.concatenate(ctx_rows, axis=0)
    attn = jnp.dot(ctx.astype(jnp.bfloat16), wo_ref[0],
                   preferred_element_type=jnp.float32) + bo_ref[0]
    x = x + attn                                # fused residual

    # ---------------- feed-forward sub-block (pre-norm) ----------------
    h = layer_norm(x, ln2g_ref, ln2b_ref)
    h1 = jnp.dot(h.astype(jnp.bfloat16), w1_ref[0],
                 preferred_element_type=jnp.float32) + b1_ref[0]
    # TODO(synk): Zipformer2 uses SwooshL/SwooshR activations; SiLU used as stand-in.
    h1 = h1 / (1.0 + jnp.exp(-h1))
    h2 = jnp.dot(h1.astype(jnp.bfloat16), w2_ref[0],
                 preferred_element_type=jnp.float32) + b2_ref[0]
    x = x + h2
    act_ref[...] = x                            # stays resident in VMEM across layers

    # ---------------- fused CTC head (linear + log_softmax) at the last layer ----------
    @pl.when(layer == num_layers - 1)
    def _():
        logits = jnp.dot(x.astype(jnp.bfloat16), wctc_ref[...],
                         preferred_element_type=jnp.float32) + bctc_ref[...]
        z = logits - jnp.max(logits, axis=-1, keepdims=True)
        logp = z - jnp.log(jnp.sum(jnp.exp(z), axis=-1, keepdims=True))
        o_ref[...] = logp.reshape(o_ref.shape)


def pallas_encoder_ctc(x, lens, enc_p, ctc_w, ctc_b, *, num_heads, batch_block=None):
    N, T0, D = x.shape
    # Pad T to a multiple of 16 so per-batch row slices and bf16 tiles are aligned.
    # Padded frames are masked as keys; padded query rows are sliced off below.
    T = ((T0 + 15) // 16) * 16
    if T != T0:
        x = jnp.pad(x, ((0, 0), (0, T - T0), (0, 0)))

    L = enc_p["wqkv"].shape[0]
    FF = enc_p["w1"].shape[-1]
    V = ctc_w.shape[1]
    Dh = D // num_heads

    if batch_block is None:
        # Whole batch per step: maximum matmul M.
        # TODO(synk): on v7x use batch_block = N // 2 so both TensorCores are fed.
        batch_block = N
    assert N % batch_block == 0
    NB = N // batch_block
    M = batch_block * T

    grid_spec = pltpu.PrefetchScalarGridSpec(
        num_scalar_prefetch=1,                                     # lens -> SMEM
        grid=(NB, L),                                              # layer axis innermost
        in_specs=[
            pl.BlockSpec((batch_block, T, D), lambda bc, l, lens: (bc, 0, 0)),
            pl.BlockSpec((1, 1, D), lambda bc, l, lens: (l, 0, 0)),        # ln1_g
            pl.BlockSpec((1, 1, D), lambda bc, l, lens: (l, 0, 0)),        # ln1_b
            pl.BlockSpec((1, D, 3 * D), lambda bc, l, lens: (l, 0, 0)),    # wqkv
            pl.BlockSpec((1, 1, 3 * D), lambda bc, l, lens: (l, 0, 0)),    # bqkv
            pl.BlockSpec((1, D, D), lambda bc, l, lens: (l, 0, 0)),        # wo
            pl.BlockSpec((1, 1, D), lambda bc, l, lens: (l, 0, 0)),        # bo
            pl.BlockSpec((1, 1, D), lambda bc, l, lens: (l, 0, 0)),        # ln2_g
            pl.BlockSpec((1, 1, D), lambda bc, l, lens: (l, 0, 0)),        # ln2_b
            pl.BlockSpec((1, D, FF), lambda bc, l, lens: (l, 0, 0)),       # w1
            pl.BlockSpec((1, 1, FF), lambda bc, l, lens: (l, 0, 0)),       # b1
            pl.BlockSpec((1, FF, D), lambda bc, l, lens: (l, 0, 0)),       # w2
            pl.BlockSpec((1, 1, D), lambda bc, l, lens: (l, 0, 0)),        # b2
            pl.BlockSpec((D, V), lambda bc, l, lens: (0, 0)),              # ctc_w (resident)
            pl.BlockSpec((1, V), lambda bc, l, lens: (0, 0)),              # ctc_b
        ],
        out_specs=pl.BlockSpec((batch_block, T, V), lambda bc, l, lens: (bc, 0, 0)),
        scratch_shapes=[pltpu.VMEM((M, D), jnp.float32)],          # resident activation
    )

    per_layer_flops = (2 * M * D * 3 * D + 2 * M * D * D + 4 * M * D * FF
                       + 4 * batch_block * num_heads * T * T * Dh)
    flops = NB * (L * per_layer_flops + 2 * M * D * V)
    trans = NB * (L * (batch_block * num_heads * T * T + M * FF) + M * V)
    weight_bytes = sum(int(a.size) * a.dtype.itemsize
                       for a in jax.tree_util.tree_leaves(enc_p))
    weight_bytes += int(ctc_w.size) * ctc_w.dtype.itemsize + int(ctc_b.size) * 4
    bytes_accessed = int(x.size) * 4 + N * T * V * 4 + NB * weight_bytes

    out = pl.pallas_call(
        functools.partial(_encoder_ctc_kernel, num_heads=num_heads,
                          batch_block=batch_block, seq_len=T),
        grid_spec=grid_spec,
        out_shape=jax.ShapeDtypeStruct((N, T, V), jnp.float32),
        compiler_params=pltpu.CompilerParams(
            dimension_semantics=("parallel", "arbitrary")),
        cost_estimate=pl.CostEstimate(flops=int(flops), transcendentals=int(trans),
                                      bytes_accessed=int(bytes_accessed)),
    )(lens, x,
      enc_p["ln1_g"], enc_p["ln1_b"], enc_p["wqkv"], enc_p["bqkv"],
      enc_p["wo"], enc_p["bo"],
      enc_p["ln2_g"], enc_p["ln2_b"], enc_p["w1"], enc_p["b1"],
      enc_p["w2"], enc_p["b2"],
      ctc_w, ctc_b.reshape(1, V))
    return out[:, :T0, :]


# --------------------------------------------------------------------------------------
# Full forward (mirrors OnnxModel.forward)
# --------------------------------------------------------------------------------------
def onnx_model_forward(x, x_lens, params):
    """x: (N, T, C) f32, x_lens: (N,) int -> (log_probs (N, T', V) f32, log_probs_len (N,) i32)."""
    x_lens = x_lens.astype(jnp.int32)
    emb, out_lens = encoder_embed(x, x_lens, params["embed"])
    # make_pad_mask + the (N,T,C)<->(T,N,C) permutes of the PyTorch wrapper are fused /
    # layout no-ops: the key-padding mask is built inside the encoder kernel from
    # `out_lens`, and everything stays batch-major.
    # TODO(synk): Zipformer2's multi-rate downsampled stacks, conv modules and
    # non-linear attention are approximated with standard pre-norm MHA + FFN blocks.
    log_probs = pallas_encoder_ctc(emb, out_lens, params["encoder"],
                                   params["ctc_w"], params["ctc_b"],
                                   num_heads=params["num_heads"])
    return log_probs, out_lens


# --------------------------------------------------------------------------------------
# Deterministic synthetic parameters (lane-dense dims; matmul weights stored in bf16,
# per-layer tensors stacked along a leading layer axis for the fused encoder kernel)
# --------------------------------------------------------------------------------------
def init_params(key, feat=16, c1=8, c2=8, d_model=128, num_heads=4, ff=256,
                vocab=128, num_layers=2):
    f1 = (feat - 3) // 2 + 1
    f2 = (f1 - 3) // 2 + 1
    keys = iter(jax.random.split(key, 32))

    def w(shape, scale=0.1):
        return (scale * jax.random.normal(next(keys), shape, dtype=jnp.float32)
                ).astype(jnp.bfloat16)

    def z(shape):
        return jnp.zeros(shape, jnp.float32)

    embed = dict(conv1_w=w((9, c1)), conv1_b=z((c1,)),
                 conv2_w=w((9 * c1, c2)), conv2_b=z((c2,)),
                 embed_w=w((f2 * c2, d_model)), embed_b=z((d_model,)))
    L = num_layers
    encoder = dict(
        ln1_g=jnp.ones((L, 1, d_model), jnp.float32), ln1_b=z((L, 1, d_model)),
        wqkv=w((L, d_model, 3 * d_model)), bqkv=z((L, 1, 3 * d_model)),
        wo=w((L, d_model, d_model)), bo=z((L, 1, d_model)),
        ln2_g=jnp.ones((L, 1, d_model), jnp.float32), ln2_b=z((L, 1, d_model)),
        w1=w((L, d_model, ff)), b1=z((L, 1, ff)),
        w2=w((L, ff, d_model)), b2=z((L, 1, d_model)),
    )
    return dict(embed=embed, encoder=encoder, num_heads=num_heads,
                ctc_w=w((d_model, vocab)), ctc_b=z((vocab,)))


if __name__ == "__main__":
    key = jax.random.PRNGKey(0)
    pkey, xkey = jax.random.split(key)

    N, T, F, VOCAB = 2, 64, 16, 128
    params = init_params(pkey, feat=F, vocab=VOCAB)

    x = jax.random.normal(xkey, (N, T, F), dtype=jnp.float32)
    x_lens = jnp.array([64, 50], dtype=jnp.int32)

    log_probs, log_probs_len = onnx_model_forward(x, x_lens, params)
    jax.block_until_ready((log_probs, log_probs_len))

    T1 = (T - 3) // 2 + 1
    T_out = (T1 - 3) // 2 + 1
    assert log_probs.shape == (N, T_out, VOCAB) and log_probs.dtype == jnp.float32
    assert log_probs_len.shape == (N,) and log_probs_len.dtype == jnp.int32
    assert bool(jnp.all(jnp.isfinite(log_probs)))
    # log_softmax rows must exponentiate-sum to 1
    assert jnp.allclose(jnp.sum(jnp.exp(log_probs), axis=-1), 1.0, atol=1e-3)
    print("KERNEL_OK")
</pallas_src>

<mosaic_0001>
module attributes {stable_mosaic.version = 11 : i64} {
  func.func @_silu_linear_kernel(%arg0: memref<434x9xf32, #tpu.memory_space<vmem>>, %arg1: memref<9x8xbf16, #tpu.memory_space<vmem>>, %arg2: memref<1x8xf32, #tpu.memory_space<vmem>>, %arg3: memref<434x8xf32, #tpu.memory_space<vmem>>) attributes {dimension_semantics = [], scalar_prefetch = 0 : i64, scratch_operands = 0 : i64, tpu.core_type = #tpu.core_type<tc>} {
    %c0 = arith.constant 0 : index
    %c0_0 = arith.constant 0 : index
    %0 = vector.load %arg0[%c0, %c0_0] : memref<434x9xf32, #tpu.memory_space<vmem>>, vector<434x9xf32>
    %1 = arith.truncf %0 : vector<434x9xf32> to vector<434x9xbf16>
    %c0_1 = arith.constant 0 : index
    %c0_2 = arith.constant 0 : index
    %2 = vector.load %arg1[%c0_1, %c0_2] : memref<9x8xbf16, #tpu.memory_space<vmem>>, vector<9x8xbf16>
    %cst = arith.constant dense<0.000000e+00> : vector<434x8xf32>
    %3 = tpu.matmul %1, %2, %cst {dimension_numbers = #tpu.dot_dimension_numbers<[1], [0], [0], [1], [0, 0, 1, 1], [], []>} : vector<434x9xbf16>, vector<9x8xbf16>, vector<434x8xf32> -> vector<434x8xf32>
    %c0_3 = arith.constant 0 : index
    %c0_4 = arith.constant 0 : index
    %4 = vector.load %arg2[%c0_3, %c0_4] : memref<1x8xf32, #tpu.memory_space<vmem>>, vector<1x8xf32>
    %5 = vector.broadcast %4 : vector<1x8xf32> to vector<434x8xf32>
    %6 = arith.addf %3, %5 : vector<434x8xf32>
    %cst_5 = arith.constant 0.000000e+00 : f32
    %7 = vector.broadcast %cst_5 : f32 to vector<434x8xf32>
    %8 = arith.subf %7, %6 : vector<434x8xf32>
    %9 = math.exp %8 : vector<434x8xf32>
    %cst_6 = arith.constant 1.000000e+00 : f32
    %10 = vector.broadcast %cst_6 : f32 to vector<434x8xf32>
    %11 = arith.addf %10, %9 : vector<434x8xf32>
    %12 = arith.divf %6, %11 : vector<434x8xf32>
    %c0_7 = arith.constant 0 : index
    %c0_8 = arith.constant 0 : index
    %13 = vector.load %arg3[%c0_7, %c0_8] : memref<434x8xf32, #tpu.memory_space<vmem>>, vector<434x8xf32>
    tpu.vector_store %arg3[%c0_7, %c0_8], %12 {strides = array<i32>} : memref<434x8xf32, #tpu.memory_space<vmem>>, vector<434x8xf32>,
    return
  }
}

</mosaic_0001>

<llo_original>
// kernel: tpu_custom_call.1
$region0: #{tpu_custom_call.1}
  #allocation0 [shape = 'u32[]', space=smem, size = 0x4, offset = 0x4, fixed_abs, tag = 'smem constant byte address 0x4 - core index']
  #allocation1 [shape = 'u32[144,128]{1,0:T(1,128)}', space=vmem, size = 0x12000, scoped, tag = 'internal scratch']
  %s0 = inlined_call_operand.vmem [shape: f32[434,9], index: 0, kind: input, shape index: {}]
  %s1 = inlined_call_operand.vmem [shape: bf16[9,8], index: 1, kind: input, shape index: {}]
  %s2 = inlined_call_operand.vmem [shape: f32[1,8], index: 2, kind: input, shape index: {}]
  %s3 = inlined_call_operand.vmem [shape: f32[434,8], index: 3, kind: output, shape index: {}]
  %s4 = sld [smem:[#allocation0]]
  $region22: #{tpu_custom_call.1} parent=0
    _
  %s6 = ssub.s32 1, %s4
  %s7 = scalar_select 0, %s6, %s4
  // Predicated region
  $region2: #{tpu_custom_call.1} parent=0 // pred_check
    _
  $region3: #{tpu_custom_call.1} parent=0 // pred_check_branch
    %9 = sbr.rel (0) target = $region5
  $region4: #{tpu_custom_call.1} parent=0 // pred_region
    _
  $region5: #{tpu_custom_call.1} parent=0 // pred_fallthru
    _
  // Predicated region
  $region6: #{tpu_custom_call.1} parent=0 // pred_check
    _
  $region7: #{tpu_custom_call.1} parent=0 // pred_check_branch
    %11 = sbr.rel (0) target = $region9
  $region8: #{tpu_custom_call.1} parent=0 // pred_region
    _
  $region9: #{tpu_custom_call.1} parent=0 // pred_fallthru
    _
  // Predicated region
  $region10: #{tpu_custom_call.1} parent=0 // pred_check
    _
  $region11: #{tpu_custom_call.1} parent=0 // pred_check_branch
    %13 = sbr.rel (0) target = $region13
  $region12: #{tpu_custom_call.1} parent=0 // pred_region
    _
  $region13: #{tpu_custom_call.1} parent=0 // pred_fallthru
    _
  %v15 = vld [vmem:[%s0] sm:$0xff]
  %v16 = vld [vmem:[%s0 + $0x8] sm:$0xff]
  %v17 = vld [vmem:[%s0 + $0x10] sm:$0xff]
  %v18 = vld [vmem:[%s0 + $0x18] sm:$0xff]
  %v19 = vld [vmem:[%s0 + $0x20] sm:$0xff]
  %v20 = vld [vmem:[%s0 + $0x28] sm:$0xff]
  %v21 = vld [vmem:[%s0 + $0x30] sm:$0xff]
  %v22 = vld [vmem:[%s0 + $0x38] sm:$0xff]
  %v23 = vld [vmem:[%s0 + $0x40] sm:$0xff]
  %v24 = vld [vmem:[%s0 + $0x48] sm:$0xff]
  %v25 = vld [vmem:[%s0 + $0x50] sm:$0xff]
  %v26 = vld [vmem:[%s0 + $0x58] sm:$0xff]
  %v27 = vld [vmem:[%s0 + $0x60] sm:$0xff]
  %v28 = vld [vmem:[%s0 + $0x68] sm:$0xff]
  %v29 = vld [vmem:[%s0 + $0x70] sm:$0xff]
  %v30 = vld [vmem:[%s0 + $0x78] sm:$0xff]
  %v31 = vld [vmem:[%s0 + $0x80] sm:$0xff]
  %v32 = vld [vmem:[%s0 + $0x88] sm:$0xff]
  %v33 = vld [vmem:[%s0 + $0x90] sm:$0xff]
  %v34 = vld [vmem:[%s0 + $0x98] sm:$0xff]
  %v35 = vld [vmem:[%s0 + $0xa0] sm:$0xff]
  %v36 = vld [vmem:[%s0 + $0xa8] sm:$0xff]
  %v37 = vld [vmem:[%s0 + $0xb0] sm:$0xff]
  %v38 = vld [vmem:[%s0 + $0xb8] sm:$0xff]
  %v39 = vld [vmem:[%s0 + $0xc0] sm:$0xff]
  %v40 = vld [vmem:[%s0 + $0xc8] sm:$0xff]
  %v41 = vld [vmem:[%s0 + $0xd0] sm:$0xff]
  %v42 = vld [vmem:[%s0 + $0xd8] sm:$0xff]
  %v43 = vld [vmem:[%s0 + $0xe0] sm:$0xff]
  %v44 = vld [vmem:[%s0 + $0xe8] sm:$0xff]
  %v45 = vld [vmem:[%s0 + $0xf0] sm:$0xff]
  %v46 = vld [vmem:[%s0 + $0xf8] sm:$0xff]
  %v47 = vld [vmem:[%s0 + $0x100] sm:$0xff]
  %v48 = vld [vmem:[%s0 + $0x108] sm:$0xff]
  %v49 = vld [vmem:[%s0 + $0x110] sm:$0xff]
  %v50 = vld [vmem:[%s0 + $0x118] sm:$0xff]
  %v51 = vld [vmem:[%s0 + $0x120] sm:$0xff]
  %v52 = vld [vmem:[%s0 + $0x128] sm:$0xff]
  %v53 = vld [vmem:[%s0 + $0x130] sm:$0xff]
  %v54 = vld [vmem:[%s0 + $0x138] sm:$0xff]
  %v55 = vld [vmem:[%s0 + $0x140] sm:$0xff]
  %v56 = vld [vmem:[%s0 + $0x148] sm:$0xff]
  %v57 = vld [vmem:[%s0 + $0x150] sm:$0xff]
  %v58 = vld [vmem:[%s0 + $0x158] sm:$0xff]
  %v59 = vld [vmem:[%s0 + $0x160] sm:$0xff]
  %v60 = vld [vmem:[%s0 + $0x168] sm:$0xff]
  %v61 = vld [vmem:[%s0 + $0x170] sm:$0xff]
  %v62 = vld [vmem:[%s0 + $0x178] sm:$0xff]
  %v63 = vld [vmem:[%s0 + $0x180] sm:$0xff]
  %v64 = vld [vmem:[%s0 + $0x188] sm:$0xff]
  %v65 = vld [vmem:[%s0 + $0x190] sm:$0xff]
  %v66 = vld [vmem:[%s0 + $0x198] sm:$0xff]
  %v67 = vld [vmem:[%s0 + $0x1a0] sm:$0xff]
  %v68 = vld [vmem:[%s0 + $0x1a8] sm:$0xff]
  %v69 = vld [vmem:[%s0 + $0x1b0] sm:$0x3]
  %v70 = vpack.c.bf16 %v16, %v15
  %v71 = vpack.c.bf16 %v18, %v17
  %v72 = vpack.c.bf16 %v20, %v19
  %v73 = vpack.c.bf16 %v22, %v21
  %v74 = vpack.c.bf16 %v24, %v23
  %v75 = vpack.c.bf16 %v26, %v25
  %v76 = vpack.c.bf16 %v28, %v27
  %v77 = vpack.c.bf16 %v30, %v29
  %v78 = vpack.c.bf16 %v32, %v31
  %v79 = vpack.c.bf16 %v34, %v33
  %v80 = vpack.c.bf16 %v36, %v35
  %v81 = vpack.c.bf16 %v38, %v37
  %v82 = vpack.c.bf16 %v40, %v39
  %v83 = vpack.c.bf16 %v42, %v41
  %v84 = vpack.c.bf16 %v44, %v43
  %v85 = vpack.c.bf16 %v46, %v45
  %v86 = vpack.c.bf16 %v48, %v47
  %v87 = vpack.c.bf16 %v50, %v49
  %v88 = vpack.c.bf16 %v52, %v51
  %v89 = vpack.c.bf16 %v54, %v53
  %v90 = vpack.c.bf16 %v56, %v55
  %v91 = vpack.c.bf16 %v58, %v57
  %v92 = vpack.c.bf16 %v60, %v59
  %v93 = vpack.c.bf16 %v62, %v61
  %v94 = vpack.c.bf16 %v64, %v63
  %v95 = vpack.c.bf16 %v66, %v65
  %v96 = vpack.c.bf16 %v68, %v67
  %v97 = vpack.c.bf16 %v69, %v69
  %v98 = vld [vmem:[%s1] sm:$0xf]
  %v99 = vld [vmem:[%s1 + $0x4] sm:$0x1]
  %v100 = vld [vmem:[%s2] sm:$0x1]
  %v102 = vlaneseq
  %v103 = vshrl.u32 %v102, 7
  %v104 = vsub.s32 0, %v103
  %v105 = vrot.slane %v100, %v104
  %v109 = vunpack.c.l.b16 %v98
  %v110 = vunpack.c.l.b16 %v99
  %v111 = vpack.c.b16 %v110, %v109
  %vm112 = vcmask 72704
  %v114 = vsel %vm112, %v70, 0
  %v117 = vsel %vm112, %v71, 0
  %v120 = vsel %vm112, %v72, 0
  %v123 = vsel %vm112, %v73, 0
  %v126 = vsel %vm112, %v74, 0
  %v129 = vsel %vm112, %v75, 0
  %v132 = vsel %vm112, %v76, 0
  %v135 = vsel %vm112, %v77, 0
  %v138 = vsel %vm112, %v78, 0
  %v141 = vsel %vm112, %v79, 0
  %v144 = vsel %vm112, %v80, 0
  %v147 = vsel %vm112, %v81, 0
  %v150 = vsel %vm112, %v82, 0
  %v153 = vsel %vm112, %v83, 0
  %v156 = vsel %vm112, %v84, 0
  %v159 = vsel %vm112, %v85, 0
  %v162 = vsel %vm112, %v86, 0
  %v165 = vsel %vm112, %v87, 0
  %v168 = vsel %vm112, %v88, 0
  %v171 = vsel %vm112, %v89, 0
  %v174 = vsel %vm112, %v90, 0
  %v177 = vsel %vm112, %v91, 0
  %v180 = vsel %vm112, %v92, 0
  %v183 = vsel %vm112, %v93, 0
  %v186 = vsel %vm112, %v94, 0
  %v189 = vsel %vm112, %v95, 0
  %v192 = vsel %vm112, %v96, 0
  %v195 = vsel %vm112, %v97, 0
  %vm197 = vcmask 1043456
  %vm198 = vcmask 1044480
  %v199 = vsel %vm197, 4294967295, 65535
  %v200 = vsel %vm198, %v199, 0
  %v202 = vand.u32 %v111, %v200
  %204 = vmatprep.subr.bf16.mxu0 0
  %205 = vmatpush1.bf16.msra.mxu0 %v202
  %206 = vmatprep.subr.bf16.mxu0 0
  %207 = vmatpush1.bf16.msra.mxu0 0
  %208 = vmatprep.subr.bf16.mxu0 0
  %209 = vmatpush1.bf16.msra.mxu0 0
  %210 = vmatprep.subr.bf16.mxu0 0
  %211 = vmatpush1.bf16.msra.mxu0 0
  %212 = vmatprep.subr.bf16.mxu0 0
  %213 = vmatpush1.bf16.msra.mxu0 0
  %214 = vmatprep.subr.bf16.mxu0 0
  %215 = vmatpush1.bf16.msra.mxu0 0
  %216 = vmatprep.subr.bf16.mxu0 0
  %217 = vmatpush1.bf16.msra.mxu0 0
  %218 = vmatprep.subr.bf16.mxu0 0
  %219 = vmatpush1.bf16.msra.mxu0 0
  %220 = vmatprep.subr.bf16.mxu0 0
  %221 = vmatpush1.bf16.msra.mxu0 0
  %222 = vmatprep.subr.bf16.mxu0 0
  %223 = vmatpush1.bf16.msra.mxu0 0
  %224 = vmatprep.subr.bf16.mxu0 0
  %225 = vmatpush1.bf16.msra.mxu0 0
  %226 = vmatprep.subr.bf16.mxu0 0
  %227 = vmatpush1.bf16.msra.mxu0 0
  %228 = vmatprep.subr.bf16.mxu0 0
  %229 = vmatpush1.bf16.msra.mxu0 0
  %230 = vmatprep.subr.bf16.mxu0 0
  %231 = vmatpush1.bf16.msra.mxu0 0
  %232 = vmatprep.subr.bf16.mxu0 0
  %233 = vmatpush1.bf16.msra.mxu0 0
  %234 = vmatprep.subr.bf16.mxu0 0
  %235 = vmatpush1.bf16.msra.mxu0 0
  %236 = vmatprep.mubr.bf16.mxu0 0
  %237 = vmatmul.mubr.bf16.gmra.mrb[0].mxu0 %v114
  %v238 = vpop.f32.mrb[0].mxu0
  %v239 = vadd.f32 %v105, %v238
  %v240 = vpop.f32.mrb[0].mxu0
  %v241 = vpop.f32.mrb[0].mxu0
  %v242 = vadd.f32 %v105, %v241
  %v243 = vpop.f32.mrb[0].mxu0
  %244 = vmatprep.mubr.bf16.mxu0 0
  %245 = vmatmul.mubr.bf16.gmra.mrb[0].mxu0 %v117
  %v246 = vpop.f32.mrb[0].mxu0
  %v247 = vadd.f32 %v105, %v246
  %v248 = vpop.f32.mrb[0].mxu0
  %v249 = vpop.f32.mrb[0].mxu0
  %v250 = vadd.f32 %v105, %v249
  %v251 = vpop.f32.mrb[0].mxu0
  %252 = vmatprep.mubr.bf16.mxu0 0
  %253 = vmatmul.mubr.bf16.gmra.mrb[0].mxu0 %v120
  %v254 = vpop.f32.mrb[0].mxu0
  %v255 = vadd.f32 %v105, %v254
  %v256 = vpop.f32.mrb[0].mxu0
  %v257 = vpop.f32.mrb[0].mxu0
  %v258 = vadd.f32 %v105, %v257
  %v259 = vpop.f32.mrb[0].mxu0
  %260 = vmatprep.mubr.bf16.mxu0 0
  %261 = vmatmul.mubr.bf16.gmra.mrb[0].mxu0 %v123
  %v262 = vpop.f32.mrb[0].mxu0
  %v263 = vadd.f32 %v105, %v262
  %v264 = vpop.f32.mrb[0].mxu0
  %v265 = vpop.f32.mrb[0].mxu0
  %v266 = vadd.f32 %v105, %v265
  %v267 = vpop.f32.mrb[0].mxu0
  %268 = vmatprep.mubr.bf16.mxu0 0
  %269 = vmatmul.mubr.bf16.gmra.mrb[0].mxu0 %v126
  %v270 = vpop.f32.mrb[0].mxu0
  %v271 = vadd.f32 %v105, %v270
  %v272 = vpop.f32.mrb[0].mxu0
  %v273 = vpop.f32.mrb[0].mxu0
  %v274 = vadd.f32 %v105, %v273
  %v275 = vpop.f32.mrb[0].mxu0
  %276 = vmatprep.mubr.bf16.mxu0 0
  %277 = vmatmul.mubr.bf16.gmra.mrb[0].mxu0 %v129
  %v278 = vpop.f32.mrb[0].mxu0
  %v279 = vadd.f32 %v105, %v278
  %v280 = vpop.f32.mrb[0].mxu0
  %v281 = vpop.f32.mrb[0].mxu0
  %v282 = vadd.f32 %v105, %v281
  %v283 = vpop.f32.mrb[0].mxu0
  %284 = vmatprep.mubr.bf16.mxu0 0
  %285 = vmatmul.mubr.bf16.gmra.mrb[0].mxu0 %v132
  %v286 = vpop.f32.mrb[0].mxu0
  %v287 = vadd.f32 %v105, %v286
  %v288 = vpop.f32.mrb[0].mxu0
  %v289 = vpop.f32.mrb[0].mxu0
  %v290 = vadd.f32 %v105, %v289
  %v291 = vpop.f32.mrb[0].mxu0
  %292 = vmatprep.mubr.bf16.mxu0 0
  %293 = vmatmul.mubr.bf16.gmra.mrb[0].mxu0 %v135
  %v294 = vpop.f32.mrb[0].mxu0
  %v295 = vadd.f32 %v105, %v294
  %v296 = vpop.f32.mrb[0].mxu0
  %v297 = vpop.f32.mrb[0].mxu0
  %v298 = vadd.f32 %v105, %v297
  %v299 = vpop.f32.mrb[0].mxu0
  %300 = vmatprep.mubr.bf16.mxu0 0
  %301 = vmatmul.mubr.bf16.gmra.mrb[0].mxu0 %v138
  %v302 = vpop.f32.mrb[0].mxu0
  %v303 = vadd.f32 %v105, %v302
  %v304 = vpop.f32.mrb[0].mxu0
  %v305 = vpop.f32.mrb[0].mxu0
  %v306 = vadd.f32 %v105, %v305
  %v307 = vpop.f32.mrb[0].mxu0
  %308 = vmatprep.mubr.bf16.mxu0 0
  %309 = vmatmul.mubr.bf16.gmra.mrb[0].mxu0 %v141
  %v310 = vpop.f32.mrb[0].mxu0
  %v311 = vadd.f32 %v105, %v310
  %v312 = vpop.f32.mrb[0].mxu0
  %v313 = vpop.f32.mrb[0].mxu0
  %v314 = vadd.f32 %v105, %v313
  %v315 = vpop.f32.mrb[0].mxu0
  %316 = vmatprep.mubr.bf16.mxu0 0
  %317 = vmatmul.mubr.bf16.gmra.mrb[0].mxu0 %v144
  %v318 = vpop.f32.mrb[0].mxu0
  %v319 = vadd.f32 %v105, %v318
  %v320 = vpop.f32.mrb[0].mxu0
  %v321 = vpop.f32.mrb[0].mxu0
  %v322 = vadd.f32 %v105, %v321
  %v323 = vpop.f32.mrb[0].mxu0
  %324 = vmatprep.mubr.bf16.mxu0 0
  %325 = vmatmul.mubr.bf16.gmra.mrb[0].mxu0 %v147
  %v326 = vpop.f32.mrb[0].mxu0
  %v327 = vadd.f32 %v105, %v326
  %v328 = vpop.f32.mrb[0].mxu0
  %v329 = vpop.f32.mrb[0].mxu0
  %v330 = vadd.f32 %v105, %v329
  %v331 = vpop.f32.mrb[0].mxu0
  %332 = vmatprep.mubr.bf16.mxu0 0
  %333 = vmatmul.mubr.bf16.gmra.mrb[0].mxu0 %v150
  %v334 = vpop.f32.mrb[0].mxu0
  %v335 = vadd.f32 %v105, %v334
  %v336 = vpop.f32.mrb[0].mxu0
  %v337 = vpop.f32.mrb[0].mxu0
  %v338 = vadd.f32 %v105, %v337
  %v339 = vpop.f32.mrb[0].mxu0
  %340 = vmatprep.mubr.bf16.mxu0 0
  %341 = vmatmul.mubr.bf16.gmra.mrb[0].mxu0 %v153
  %v342 = vpop.f32.mrb[0].mxu0
  %v343 = vadd.f32 %v105, %v342
  %v344 = vpop.f32.mrb[0].mxu0
  %v345 = vpop.f32.mrb[0].mxu0
  %v346 = vadd.f32 %v105, %v345
  %v347 = vpop.f32.mrb[0].mxu0
  %348 = vmatprep.mubr.bf16.mxu0 0
  %349 = vmatmul.mubr.bf16.gmra.mrb[0].mxu0 %v156
  %v350 = vpop.f32.mrb[0].mxu0
  %v351 = vadd.f32 %v105, %v350
  %v352 = vpop.f32.mrb[0].mxu0
  %v353 = vpop.f32.mrb[0].mxu0
  %v354 = vadd.f32 %v105, %v353
  %v355 = vpop.f32.mrb[0].mxu0
  %356 = vmatprep.mubr.bf16.mxu0 0
  %357 = vmatmul.mubr.bf16.gmra.mrb[0].mxu0 %v159
  %v358 = vpop.f32.mrb[0].mxu0
  %v359 = vadd.f32 %v105, %v358
  %v360 = vpop.f32.mrb[0].mxu0
  %v361 = vpop.f32.mrb[0].mxu0
  %v362 = vadd.f32 %v105, %v361
  %v363 = vpop.f32.mrb[0].mxu0
  %364 = vmatprep.mubr.bf16.mxu0 0
  %365 = vmatmul.mubr.bf16.gmra.mrb[0].mxu0 %v162
  %v366 = vpop.f32.mrb[0].mxu0
  %v367 = vadd.f32 %v105, %v366
  %v368 = vpop.f32.mrb[0].mxu0
  %v369 = vpop.f32.mrb[0].mxu0
  %v370 = vadd.f32 %v105, %v369
  %v371 = vpop.f32.mrb[0].mxu0
  %372 = vmatprep.mubr.bf16.mxu0 0
  %373 = vmatmul.mubr.bf16.gmra.mrb[0].mxu0 %v165
  %v374 = vpop.f32.mrb[0].mxu0
  %v375 = vadd.f32 %v105, %v374
  %v376 = vpop.f32.mrb[0].mxu0
  %v377 = vpop.f32.mrb[0].mxu0
  %v378 = vadd.f32 %v105, %v377
  %v379 = vpop.f32.mrb[0].mxu0
  %380 = vmatprep.mubr.bf16.mxu0 0
  %381 = vmatmul.mubr.bf16.gmra.mrb[0].mxu0 %v168
  %v382 = vpop.f32.mrb[0].mxu0
  %v383 = vadd.f32 %v105, %v382
  %v384 = vpop.f32.mrb[0].mxu0
  %v385 = vpop.f32.mrb[0].mxu0
  %v386 = vadd.f32 %v105, %v385
  %v387 = vpop.f32.mrb[0].mxu0
  %388 = vmatprep.mubr.bf16.mxu0 0
  %389 = vmatmul.mubr.bf16.gmra.mrb[0].mxu0 %v171
  %v390 = vpop.f32.mrb[0].mxu0
  %v391 = vadd.f32 %v105, %v390
  %v392 = vpop.f32.mrb[0].mxu0
  %v393 = vpop.f32.mrb[0].mxu0
  %v394 = vadd.f32 %v105, %v393
  %v395 = vpop.f32.mrb[0].mxu0
  %396 = vmatprep.mubr.bf16.mxu0 0
  %397 = vmatmul.mubr.bf16.gmra.mrb[0].mxu0 %v174
  %v398 = vpop.f32.mrb[0].mxu0
  %v399 = vadd.f32 %v105, %v398
  %v400 = vpop.f32.mrb[0].mxu0
  %v401 = vpop.f32.mrb[0].mxu0
  %v402 = vadd.f32 %v105, %v401
  %v403 = vpop.f32.mrb[0].mxu0
  %404 = vmatprep.mubr.bf16.mxu0 0
  %405 = vmatmul.mubr.bf16.gmra.mrb[0].mxu0 %v177
  %v406 = vpop.f32.mrb[0].mxu0
  %v407 = vadd.f32 %v105, %v406
  %v408 = vpop.f32.mrb[0].mxu0
  %v409 = vpop.f32.mrb[0].mxu0
  %v410 = vadd.f32 %v105, %v409
  %v411 = vpop.f32.mrb[0].mxu0
  %412 = vmatprep.mubr.bf16.mxu0 0
  %413 = vmatmul.mubr.bf16.gmra.mrb[0].mxu0 %v180
  %v414 = vpop.f32.mrb[0].mxu0
  %v415 = vadd.f32 %v105, %v414
  %v416 = vpop.f32.mrb[0].mxu0
  %v417 = vpop.f32.mrb[0].mxu0
  %v418 = vadd.f32 %v105, %v417
  %v419 = vpop.f32.mrb[0].mxu0
  %420 = vmatprep.mubr.bf16.mxu0 0
  %421 = vmatmul.mubr.bf16.gmra.mrb[0].mxu0 %v183
  %v422 = vpop.f32.mrb[0].mxu0
  %v423 = vadd.f32 %v105, %v422
  %v424 = vpop.f32.mrb[0].mxu0
  %v425 = vpop.f32.mrb[0].mxu0
  %v426 = vadd.f32 %v105, %v425
  %v427 = vpop.f32.mrb[0].mxu0
  %428 = vmatprep.mubr.bf16.mxu0 0
  %429 = vmatmul.mubr.bf16.gmra.mrb[0].mxu0 %v186
  %v430 = vpop.f32.mrb[0].mxu0
  %v431 = vadd.f32 %v105, %v430
  %v432 = vpop.f32.mrb[0].mxu0
  %v433 = vpop.f32.mrb[0].mxu0
  %v434 = vadd.f32 %v105, %v433
  %v435 = vpop.f32.mrb[0].mxu0
  %436 = vmatprep.mubr.bf16.mxu0 0
  %437 = vmatmul.mubr.bf16.gmra.mrb[0].mxu0 %v189
  %v438 = vpop.f32.mrb[0].mxu0
  %v439 = vadd.f32 %v105, %v438
  %v440 = vpop.f32.mrb[0].mxu0
  %v441 = vpop.f32.mrb[0].mxu0
  %v442 = vadd.f32 %v105, %v441
  %v443 = vpop.f32.mrb[0].mxu0
  %444 = vmatprep.mubr.bf16.mxu0 0
  %445 = vmatmul.mubr.bf16.gmra.mrb[0].mxu0 %v192
  %v446 = vpop.f32.mrb[0].mxu0
  %v447 = vadd.f32 %v105, %v446
  %v448 = vpop.f32.mrb[0].mxu0
  %v449 = vpop.f32.mrb[0].mxu0
  %v450 = vadd.f32 %v105, %v449
  %v451 = vpop.f32.mrb[0].mxu0
  %452 = vmatprep.mubr.bf16.mxu0 0
  %453 = vmatmul.mubr.bf16.gmra.mrb[0].mxu0 %v195
  %v454 = vpop.f32.mrb[0].mxu0
  %v455 = vadd.f32 %v105, %v454
  %v456 = vpop.f32.mrb[0].mxu0
  %v457 = vpop.f32.mrb[0].mxu0
  %v458 = vpop.f32.mrb[0].mxu0
  %459 = vdwg.mxu0
  %v460 = vsub.f32 0.0, %v239
  %v461 = vsub.f32 0.0, %v242
  %v462 = vsub.f32 0.0, %v247
  %v463 = vsub.f32 0.0, %v250
  %v464 = vsub.f32 0.0, %v255
  %v465 = vsub.f32 0.0, %v258
  %v466 = vsub.f32 0.0, %v263
  %v467 = vsub.f32 0.0, %v266
  %v468 = vsub.f32 0.0, %v271
  %v469 = vsub.f32 0.0, %v274
  %v470 = vsub.f32 0.0, %v279
  %v471 = vsub.f32 0.0, %v282
  %v472 = vsub.f32 0.0, %v287
  %v473 = vsub.f32 0.0, %v290
  %v474 = vsub.f32 0.0, %v295
  %v475 = vsub.f32 0.0, %v298
  %v476 = vsub.f32 0.0, %v303
  %v477 = vsub.f32 0.0, %v306
  %v478 = vsub.f32 0.0, %v311
  %v479 = vsub.f32 0.0, %v314
  %v480 = vsub.f32 0.0, %v319
  %v481 = vsub.f32 0.0, %v322
  %v482 = vsub.f32 0.0, %v327
  %v483 = vsub.f32 0.0, %v330
  %v484 = vsub.f32 0.0, %v335
  %v485 = vsub.f32 0.0, %v338
  %v486 = vsub.f32 0.0, %v343
  %v487 = vsub.f32 0.0, %v346
  %v488 = vsub.f32 0.0, %v351
  %v489 = vsub.f32 0.0, %v354
  %v490 = vsub.f32 0.0, %v359
  %v491 = vsub.f32 0.0, %v362
  %v492 = vsub.f32 0.0, %v367
  %v493 = vsub.f32 0.0, %v370
  %v494 = vsub.f32 0.0, %v375
  %v495 = vsub.f32 0.0, %v378
  %v496 = vsub.f32 0.0, %v383
  %v497 = vsub.f32 0.0, %v386
  %v498 = vsub.f32 0.0, %v391
  %v499 = vsub.f32 0.0, %v394
  %v500 = vsub.f32 0.0, %v399
  %v501 = vsub.f32 0.0, %v402
  %v502 = vsub.f32 0.0, %v407
  %v503 = vsub.f32 0.0, %v410
  %v504 = vsub.f32 0.0, %v415
  %v505 = vsub.f32 0.0, %v418
  %v506 = vsub.f32 0.0, %v423
  %v507 = vsub.f32 0.0, %v426
  %v508 = vsub.f32 0.0, %v431
  %v509 = vsub.f32 0.0, %v434
  %v510 = vsub.f32 0.0, %v439
  %v511 = vsub.f32 0.0, %v442
  %v512 = vsub.f32 0.0, %v447
  %v513 = vsub.f32 0.0, %v450
  %v514 = vsub.f32 0.0, %v455
  %v515 = vmul.f32 %v460, 1.442695
  %v516 = vpow.pop %v515
  %v517 = vmul.f32 %v461, 1.442695
  %v518 = vpow.pop %v517
  %v519 = vmul.f32 %v462, 1.442695
  %v520 = vpow.pop %v519
  %v521 = vmul.f32 %v463, 1.442695
  %v522 = vpow.pop %v521
  %v523 = vmul.f32 %v464, 1.442695
  %v524 = vpow.pop %v523
  %v525 = vmul.f32 %v465, 1.442695
  %v526 = vpow.pop %v525
  %v527 = vmul.f32 %v466, 1.442695
  %v528 = vpow.pop %v527
  %v529 = vmul.f32 %v467, 1.442695
  %v530 = vpow.pop %v529
  %v531 = vmul.f32 %v468, 1.442695
  %v532 = vpow.pop %v531
  %v533 = vmul.f32 %v469, 1.442695
  %v534 = vpow.pop %v533
  %v535 = vmul.f32 %v470, 1.442695
  %v536 = vpow.pop %v535
  %v537 = vmul.f32 %v471, 1.442695
  %v538 = vpow.pop %v537
  %v539 = vmul.f32 %v472, 1.442695
  %v540 = vpow.pop %v539
  %v541 = vmul.f32 %v473, 1.442695
  %v542 = vpow.pop %v541
  %v543 = vmul.f32 %v474, 1.442695
  %v544 = vpow.pop %v543
  %v545 = vmul.f32 %v475, 1.442695
  %v546 = vpow.pop %v545
  %v547 = vmul.f32 %v476, 1.442695
  %v548 = vpow.pop %v547
  %v549 = vmul.f32 %v477, 1.442695
  %v550 = vpow.pop %v549
  %v551 = vmul.f32 %v478, 1.442695
  %v552 = vpow.pop %v551
  %v553 = vmul.f32 %v479, 1.442695
  %v554 = vpow.pop %v553
  %v555 = vmul.f32 %v480, 1.442695
  %v556 = vpow.pop %v555
  %v557 = vmul.f32 %v481, 1.442695
  %v558 = vpow.pop %v557
  %v559 = vmul.f32 %v482, 1.442695
  %v560 = vpow.pop %v559
  %v561 = vmul.f32 %v483, 1.442695
  %v562 = vpow.pop %v561
  %v563 = vmul.f32 %v484, 1.442695
  %v564 = vpow.pop %v563
  %v565 = vmul.f32 %v485, 1.442695
  %v566 = vpow.pop %v565
  %v567 = vmul.f32 %v486, 1.442695
  %v568 = vpow.pop %v567
  %v569 = vmul.f32 %v487, 1.442695
  %v570 = vpow.pop %v569
  %v571 = vmul.f32 %v488, 1.442695
  %v572 = vpow.pop %v571
  %v573 = vmul.f32 %v489, 1.442695
  %v574 = vpow.pop %v573
  %v575 = vmul.f32 %v490, 1.442695
  %v576 = vpow.pop %v575
  %v577 = vmul.f32 %v491, 1.442695
  %v578 = vpow.pop %v577
  %v579 = vmul.f32 %v492, 1.442695
  %v580 = vpow.pop %v579
  %v581 = vmul.f32 %v493, 1.442695
  %v582 = vpow.pop %v581
  %v583 = vmul.f32 %v494, 1.442695
  %v584 = vpow.pop %v583
  %v585 = vmul.f32 %v495, 1.442695
  %v586 = vpow.pop %v585
  %v587 = vmul.f32 %v496, 1.442695
  %v588 = vpow.pop %v587
  %v589 = vmul.f32 %v497, 1.442695
  %v590 = vpow.pop %v589
  %v591 = vmul.f32 %v498, 1.442695
  %v592 = vpow.pop %v591
  %v593 = vmul.f32 %v499, 1.442695
  %v594 = vpow.pop %v593
  %v595 = vmul.f32 %v500, 1.442695
  %v596 = vpow.pop %v595
  %v597 = vmul.f32 %v501, 1.442695
  %v598 = vpow.pop %v597
  %v599 = vmul.f32 %v502, 1.442695
  %v600 = vpow.pop %v599
  %v601 = vmul.f32 %v503, 1.442695
  %v602 = vpow.pop %v601
  %v603 = vmul.f32 %v504, 1.442695
  %v604 = vpow.pop %v603
  %v605 = vmul.f32 %v505, 1.442695
  %v606 = vpow.pop %v605
  %v607 = vmul.f32 %v506, 1.442695
  %v608 = vpow.pop %v607
  %v609 = vmul.f32 %v507, 1.442695
  %v610 = vpow.pop %v609
  %v611 = vmul.f32 %v508, 1.442695
  %v612 = vpow.pop %v611
  %v613 = vmul.f32 %v509, 1.442695
  %v614 = vpow.pop %v613
  %v615 = vmul.f32 %v510, 1.442695
  %v616 = vpow.pop %v615
  %v617 = vmul.f32 %v511, 1.442695
  %v618 = vpow.pop %v617
  %v619 = vmul.f32 %v512, 1.442695
  %v620 = vpow.pop %v619
  %v621 = vmul.f32 %v513, 1.442695
  %v622 = vpow.pop %v621
  %v623 = vmul.f32 %v514, 1.442695
  %v624 = vpow.pop %v623
  %v625 = vadd.f32 %v516, 1.0
  %v626 = vadd.f32 %v518, 1.0
  %v627 = vadd.f32 %v520, 1.0
  %v628 = vadd.f32 %v522, 1.0
  %v629 = vadd.f32 %v524, 1.0
  %v630 = vadd.f32 %v526, 1.0
  %v631 = vadd.f32 %v528, 1.0
  %v632 = vadd.f32 %v530, 1.0
  %v633 = vadd.f32 %v532, 1.0
  %v634 = vadd.f32 %v534, 1.0
  %v635 = vadd.f32 %v536, 1.0
  %v636 = vadd.f32 %v538, 1.0
  %v637 = vadd.f32 %v540, 1.0
  %v638 = vadd.f32 %v542, 1.0
  %v639 = vadd.f32 %v544, 1.0
  %v640 = vadd.f32 %v546, 1.0
  %v641 = vadd.f32 %v548, 1.0
  %v642 = vadd.f32 %v550, 1.0
  %v643 = vadd.f32 %v552, 1.0
  %v644 = vadd.f32 %v554, 1.0
  %v645 = vadd.f32 %v556, 1.0
  %v646 = vadd.f32 %v558, 1.0
  %v647 = vadd.f32 %v560, 1.0
  %v648 = vadd.f32 %v562, 1.0
  %v649 = vadd.f32 %v564, 1.0
  %v650 = vadd.f32 %v566, 1.0
  %v651 = vadd.f32 %v568, 1.0
  %v652 = vadd.f32 %v570, 1.0
  %v653 = vadd.f32 %v572, 1.0
  %v654 = vadd.f32 %v574, 1.0
  %v655 = vadd.f32 %v576, 1.0
  %v656 = vadd.f32 %v578, 1.0
  %v657 = vadd.f32 %v580, 1.0
  %v658 = vadd.f32 %v582, 1.0
  %v659 = vadd.f32 %v584, 1.0
  %v660 = vadd.f32 %v586, 1.0
  %v661 = vadd.f32 %v588, 1.0
  %v662 = vadd.f32 %v590, 1.0
  %v663 = vadd.f32 %v592, 1.0
  %v664 = vadd.f32 %v594, 1.0
  %v665 = vadd.f32 %v596, 1.0
  %v666 = vadd.f32 %v598, 1.0
  %v667 = vadd.f32 %v600, 1.0
  %v668 = vadd.f32 %v602, 1.0
  %v669 = vadd.f32 %v604, 1.0
  %v670 = vadd.f32 %v606, 1.0
  %v671 = vadd.f32 %v608, 1.0
  %v672 = vadd.f32 %v610, 1.0
  %v673 = vadd.f32 %v612, 1.0
  %v674 = vadd.f32 %v614, 1.0
  %v675 = vadd.f32 %v616, 1.0
  %v676 = vadd.f32 %v618, 1.0
  %v677 = vadd.f32 %v620, 1.0
  %v678 = vadd.f32 %v622, 1.0
  %v679 = vadd.f32 %v624, 1.0
  %v680 = vrcp.pop %v625
  %v681 = vmul.f32 %v239, %v680
  %v682 = vrcp.pop %v626
  %v683 = vmul.f32 %v242, %v682
  %v684 = vrcp.pop %v627
  %v685 = vmul.f32 %v247, %v684
  %v686 = vrcp.pop %v628
  %v687 = vmul.f32 %v250, %v686
  %v688 = vrcp.pop %v629
  %v689 = vmul.f32 %v255, %v688
  %v690 = vrcp.pop %v630
  %v691 = vmul.f32 %v258, %v690
  %v692 = vrcp.pop %v631
  %v693 = vmul.f32 %v263, %v692
  %v694 = vrcp.pop %v632
  %v695 = vmul.f32 %v266, %v694
  %v696 = vrcp.pop %v633
  %v697 = vmul.f32 %v271, %v696
  %v698 = vrcp.pop %v634
  %v699 = vmul.f32 %v274, %v698
  %v700 = vrcp.pop %v635
  %v701 = vmul.f32 %v279, %v700
  %v702 = vrcp.pop %v636
  %v703 = vmul.f32 %v282, %v702
  %v704 = vrcp.pop %v637
  %v705 = vmul.f32 %v287, %v704
  %v706 = vrcp.pop %v638
  %v707 = vmul.f32 %v290, %v706
  %v708 = vrcp.pop %v639
  %v709 = vmul.f32 %v295, %v708
  %v710 = vrcp.pop %v640
  %v711 = vmul.f32 %v298, %v710
  %v712 = vrcp.pop %v641
  %v713 = vmul.f32 %v303, %v712
  %v714 = vrcp.pop %v642
  %v715 = vmul.f32 %v306, %v714
  %v716 = vrcp.pop %v643
  %v717 = vmul.f32 %v311, %v716
  %v718 = vrcp.pop %v644
  %v719 = vmul.f32 %v314, %v718
  %v720 = vrcp.pop %v645
  %v721 = vmul.f32 %v319, %v720
  %v722 = vrcp.pop %v646
  %v723 = vmul.f32 %v322, %v722
  %v724 = vrcp.pop %v647
  %v725 = vmul.f32 %v327, %v724
  %v726 = vrcp.pop %v648
  %v727 = vmul.f32 %v330, %v726
  %v728 = vrcp.pop %v649
  %v729 = vmul.f32 %v335, %v728
  %v730 = vrcp.pop %v650
  %v731 = vmul.f32 %v338, %v730
  %v732 = vrcp.pop %v651
  %v733 = vmul.f32 %v343, %v732
  %v734 = vrcp.pop %v652
  %v735 = vmul.f32 %v346, %v734
  %v736 = vrcp.pop %v653
  %v737 = vmul.f32 %v351, %v736
  %v738 = vrcp.pop %v654
  %v739 = vmul.f32 %v354, %v738
  %v740 = vrcp.pop %v655
  %v741 = vmul.f32 %v359, %v740
  %v742 = vrcp.pop %v656
  %v743 = vmul.f32 %v362, %v742
  %v744 = vrcp.pop %v657
  %v745 = vmul.f32 %v367, %v744
  %v746 = vrcp.pop %v658
  %v747 = vmul.f32 %v370, %v746
  %v748 = vrcp.pop %v659
  %v749 = vmul.f32 %v375, %v748
  %v750 = vrcp.pop %v660
  %v751 = vmul.f32 %v378, %v750
  %v752 = vrcp.pop %v661
  %v753 = vmul.f32 %v383, %v752
  %v754 = vrcp.pop %v662
  %v755 = vmul.f32 %v386, %v754
  %v756 = vrcp.pop %v663
  %v757 = vmul.f32 %v391, %v756
  %v758 = vrcp.pop %v664
  %v759 = vmul.f32 %v394, %v758
  %v760 = vrcp.pop %v665
  %v761 = vmul.f32 %v399, %v760
  %v762 = vrcp.pop %v666
  %v763 = vmul.f32 %v402, %v762
  %v764 = vrcp.pop %v667
  %v765 = vmul.f32 %v407, %v764
  %v766 = vrcp.pop %v668
  %v767 = vmul.f32 %v410, %v766
  %v768 = vrcp.pop %v669
  %v769 = vmul.f32 %v415, %v768
  %v770 = vrcp.pop %v670
  %v771 = vmul.f32 %v418, %v770
  %v772 = vrcp.pop %v671
  %v773 = vmul.f32 %v423, %v772
  %v774 = vrcp.pop %v672
  %v775 = vmul.f32 %v426, %v774
  %v776 = vrcp.pop %v673
  %v777 = vmul.f32 %v431, %v776
  %v778 = vrcp.pop %v674
  %v779 = vmul.f32 %v434, %v778
  %v780 = vrcp.pop %v675
  %v781 = vmul.f32 %v439, %v780
  %v782 = vrcp.pop %v676
  %v783 = vmul.f32 %v442, %v782
  %v784 = vrcp.pop %v677
  %v785 = vmul.f32 %v447, %v784
  %v786 = vrcp.pop %v678
  %v787 = vmul.f32 %v450, %v786
  %v788 = vrcp.pop %v679
  %v789 = vmul.f32 %v455, %v788
  %vm790 = vcmask 64512
  %791 = vst.msk [vmem:[%s3] sm:$0xff] %vm790, %v681
  %792 = vst.msk [vmem:[%s3 + $0x8] sm:$0xff] %vm790, %v683
  %793 = vst.msk [vmem:[%s3 + $0x10] sm:$0xff] %vm790, %v685
  %794 = vst.msk [vmem:[%s3 + $0x18] sm:$0xff] %vm790, %v687
  %795 = vst.msk [vmem:[%s3 + $0x20] sm:$0xff] %vm790, %v689
  %796 = vst.msk [vmem:[%s3 + $0x28] sm:$0xff] %vm790, %v691
  %797 = vst.msk [vmem:[%s3 + $0x30] sm:$0xff] %vm790, %v693
  %798 = vst.msk [vmem:[%s3 + $0x38] sm:$0xff] %vm790, %v695
  %799 = vst.msk [vmem:[%s3 + $0x40] sm:$0xff] %vm790, %v697
  %800 = vst.msk [vmem:[%s3 + $0x48] sm:$0xff] %vm790, %v699
  %801 = vst.msk [vmem:[%s3 + $0x50] sm:$0xff] %vm790, %v701
  %802 = vst.msk [vmem:[%s3 + $0x58] sm:$0xff] %vm790, %v703
  %803 = vst.msk [vmem:[%s3 + $0x60] sm:$0xff] %vm790, %v705
  %804 = vst.msk [vmem:[%s3 + $0x68] sm:$0xff] %vm790, %v707
  %805 = vst.msk [vmem:[%s3 + $0x70] sm:$0xff] %vm790, %v709
  %806 = vst.msk [vmem:[%s3 + $0x78] sm:$0xff] %vm790, %v711
  %807 = vst.msk [vmem:[%s3 + $0x80] sm:$0xff] %vm790, %v713
  %808 = vst.msk [vmem:[%s3 + $0x88] sm:$0xff] %vm790, %v715
  %809 = vst.msk [vmem:[%s3 + $0x90] sm:$0xff] %vm790, %v717
  %810 = vst.msk [vmem:[%s3 + $0x98] sm:$0xff] %vm790, %v719
  %811 = vst.msk [vmem:[%s3 + $0xa0] sm:$0xff] %vm790, %v721
  %812 = vst.msk [vmem:[%s3 + $0xa8] sm:$0xff] %vm790, %v723
  %813 = vst.msk [vmem:[%s3 + $0xb0] sm:$0xff] %vm790, %v725
  %814 = vst.msk [vmem:[%s3 + $0xb8] sm:$0xff] %vm790, %v727
  %815 = vst.msk [vmem:[%s3 + $0xc0] sm:$0xff] %vm790, %v729
  %816 = vst.msk [vmem:[%s3 + $0xc8] sm:$0xff] %vm790, %v731
  %817 = vst.msk [vmem:[%s3 + $0xd0] sm:$0xff] %vm790, %v733
  %818 = vst.msk [vmem:[%s3 + $0xd8] sm:$0xff] %vm790, %v735
  %819 = vst.msk [vmem:[%s3 + $0xe0] sm:$0xff] %vm790, %v737
  %820 = vst.msk [vmem:[%s3 + $0xe8] sm:$0xff] %vm790, %v739
  %821 = vst.msk [vmem:[%s3 + $0xf0] sm:$0xff] %vm790, %v741
  %822 = vst.msk [vmem:[%s3 + $0xf8] sm:$0xff] %vm790, %v743
  %823 = vst.msk [vmem:[%s3 + $0x100] sm:$0xff] %vm790, %v745
  %824 = vst.msk [vmem:[%s3 + $0x108] sm:$0xff] %vm790, %v747
  %825 = vst.msk [vmem:[%s3 + $0x110] sm:$0xff] %vm790, %v749
  %826 = vst.msk [vmem:[%s3 + $0x118] sm:$0xff] %vm790, %v751
  %827 = vst.msk [vmem:[%s3 + $0x120] sm:$0xff] %vm790, %v753
  %828 = vst.msk [vmem:[%s3 + $0x128] sm:$0xff] %vm790, %v755
  %829 = vst.msk [vmem:[%s3 + $0x130] sm:$0xff] %vm790, %v757
  %830 = vst.msk [vmem:[%s3 + $0x138] sm:$0xff] %vm790, %v759
  %831 = vst.msk [vmem:[%s3 + $0x140] sm:$0xff] %vm790, %v761
  %832 = vst.msk [vmem:[%s3 + $0x148] sm:$0xff] %vm790, %v763
  %833 = vst.msk [vmem:[%s3 + $0x150] sm:$0xff] %vm790, %v765
  %834 = vst.msk [vmem:[%s3 + $0x158] sm:$0xff] %vm790, %v767
  %835 = vst.msk [vmem:[%s3 + $0x160] sm:$0xff] %vm790, %v769
  %836 = vst.msk [vmem:[%s3 + $0x168] sm:$0xff] %vm790, %v771
  %837 = vst.msk [vmem:[%s3 + $0x170] sm:$0xff] %vm790, %v773
  %838 = vst.msk [vmem:[%s3 + $0x178] sm:$0xff] %vm790, %v775
  %839 = vst.msk [vmem:[%s3 + $0x180] sm:$0xff] %vm790, %v777
  %840 = vst.msk [vmem:[%s3 + $0x188] sm:$0xff] %vm790, %v779
  %841 = vst.msk [vmem:[%s3 + $0x190] sm:$0xff] %vm790, %v781
  %842 = vst.msk [vmem:[%s3 + $0x198] sm:$0xff] %vm790, %v783
  %843 = vst.msk [vmem:[%s3 + $0x1a0] sm:$0xff] %vm790, %v785
  %844 = vst.msk [vmem:[%s3 + $0x1a8] sm:$0xff] %vm790, %v787
  %vm845 = vcmask 58368
  %846 = vst.msk [vmem:[%s3 + $0x1b0] sm:$0x3] %vm845, %v789
  // Predicated region
  $region14: #{tpu_custom_call.1} parent=0 // pred_check
    _
  $region15: #{tpu_custom_call.1} parent=0 // pred_check_branch
    %848 = sbr.rel (0) target = $region17
  $region16: #{tpu_custom_call.1} parent=0 // pred_region
    _
  $region17: #{tpu_custom_call.1} parent=0 // pred_fallthru
    _
  // Predicated region
  $region18: #{tpu_custom_call.1} parent=0 // pred_check
    _
  $region19: #{tpu_custom_call.1} parent=0 // pred_check_branch
    %850 = sbr.rel (0) target = $region21
  $region20: #{tpu_custom_call.1} parent=0 // pred_region
    _
  $region21: #{tpu_custom_call.1} parent=0 // pred_fallthru
    _

</llo_original>
